<compile_context>
chip_gen: v7x
topology: tpu7x:2x2x1
jax: 0.10.0
libtpu: 0.0.40
codegen_flags: <defaults>
</compile_context>

<pallas_src>
import functools

import jax
import jax.numpy as jnp
from jax import lax
from jax.experimental import pallas as pl
from jax.experimental.pallas import tpu as pltpu


def _ponet_kernel(x_ref, w_ref, b_ref, o_ref, *,
                  d, L, NB, local_k, segment_k, fused, matmul_dtype):
    M = NB * L
    x2 = x_ref[...].reshape(M, d)
    if x2.dtype != matmul_dtype:
        x2 = x2.astype(matmul_dtype)          # bf16 MXU operands by default

    # ---- fc ----------------------------------------------------------------
    if fused:
        # One (M, d) @ (d, 6d) MXU pass; d % 128 == 0 keeps the k*d slices
        # lane-aligned (no relayout).
        h = jnp.dot(x2, w_ref[...], preferred_element_type=jnp.float32)
        h = h + b_ref[...].astype(jnp.float32)                   # (M, 6d) f32
        hQ, hK, hV, hs, hl, ho = (h[:, k * d:(k + 1) * d] for k in range(6))
    else:
        # Fallback when d is not a multiple of 128: per-head (d, d) matmuls
        # avoid non-lane-aligned slices of a wide result.
        def head(k):
            return (jnp.dot(x2, w_ref[k], preferred_element_type=jnp.float32)
                    + b_ref[k].astype(jnp.float32))
        hQ, hK, hV, hs, hl, ho = (head(k) for k in range(6))

    # ---- global attention (vectorized over the NB sequences) ---------------
    # TODO(synk): for large L*d move qk / g_prime onto the MXU as batched
    # matvecs (einsum) instead of VPU multiply + XLU reductions.
    hQ3 = hQ.reshape(NB, L, d)
    hK3 = hK.reshape(NB, L, d)
    hV3 = hV.reshape(NB, L, d)
    ho3 = ho.reshape(NB, L, d)
    g = jnp.mean(hQ3, axis=1, keepdims=True)                 # (NB, 1, d)
    qk = jnp.sum(hK3 * g, axis=-1, keepdims=True)            # (NB, L, 1)
    m = jnp.max(qk, axis=1, keepdims=True)                   # (NB, 1, 1)
    e = jnp.exp(qk - m)
    attn = e / jnp.sum(e, axis=1, keepdims=True)             # exact divide
    g_prime = jnp.sum(attn * hV3, axis=1, keepdims=True)     # (NB, 1, d)
    g_out = (g_prime * ho3).reshape(M, d)

    # ---- per-row position masks (native (M, d) layout, computed once) ------
    row = lax.broadcasted_iota(jnp.int32, (M, d), 0)
    pos = row % L                       # position within its own sequence
    seg_pos = row % segment_k           # position within its own segment
    neg = jnp.float32(-jnp.inf)

    # ---- segment max-pool (kernel=stride=segment_k) + repeat_interleave ----
    # Segmented all-reduce max by doubling: ceil(log2(segment_k)) rounds of
    # masked roll+max in native layout (no sub-8-sublane reshape / relayout).
    s_red = hs
    o = 1
    while o < segment_k:
        up = pltpu.roll(s_red, shift=o, axis=0)          # brings row i - o
        dn = pltpu.roll(s_red, shift=M - o, axis=0)      # brings row i + o
        s_red = jnp.maximum(s_red, jnp.where(seg_pos >= o, up, neg))
        s_red = jnp.maximum(s_red,
                            jnp.where(seg_pos <= segment_k - 1 - o, dn, neg))
        o *= 2
    s_out = s_red * ho

    # ---- local max-pool (kernel=local_k, stride=1, pad=local_k//2, -inf) ---
    p = local_k // 2
    l_out = hl                                           # center tap
    for j in range(1, p + 1):
        up = pltpu.roll(hl, shift=j, axis=0)             # row i - j
        dn = pltpu.roll(hl, shift=M - j, axis=0)         # row i + j
        l_out = jnp.maximum(l_out, jnp.where(pos >= j, up, neg))
        l_out = jnp.maximum(l_out, jnp.where(pos <= L - 1 - j, dn, neg))

    out2 = g_out + s_out + l_out
    o_ref[...] = out2.reshape(NB, L, d).astype(o_ref.dtype)


def _vmem_capacity_bytes():
    """Per-core VMEM capacity (v5e/v6e: 128 MiB, v7x: 64 MiB)."""
    try:
        return int(pltpu.get_tpu_info().vmem_capacity_bytes)
    except Exception:          # query unavailable (e.g. interpret mode)
        return 64 * 2**20      # conservative fallback fits every generation


def _pick_block_b(B, L, d, in_bytes, out_bytes, vmem_cap, weight_bytes):
    """Largest divisor of B whose per-grid-step working set fits the budget."""
    # Per-sequence working set: double-buffered in/out blocks plus ~28 f32
    # (L, d)-sized temporaries (fused h + head slices, roll candidates,
    # int32 position iotas / masks, g/s/l partial outputs).
    per_seq = L * d * (2 * in_bytes + 2 * out_bytes + 28 * 4)
    budget = max(2 * 2**20, int(0.8 * vmem_cap) - weight_bytes - 8 * 2**20)
    nb = int(max(1, min(B, budget // max(per_seq, 1))))
    if B >= 4:
        # Keep the grid >= 4 steps: lets v7x's two TensorCores split the
        # parallel batch axis and gives the DMA pipeline steps to overlap.
        nb = max(1, min(nb, B // 4))
    while B % nb:
        nb -= 1
    return nb


def ponet_block(x, W, b, *, local_k, segment_k, block_b=None,
                matmul_dtype=jnp.bfloat16):
    """x: (B, L, d).  W: (d, 6d) (== nn.Linear(d, 6d).weight.T).  b: (1, 6d)."""
    B, L, d = x.shape
    assert W.shape == (d, 6 * d) and b.shape == (1, 6 * d)
    assert L % segment_k == 0, "segment pooling requires L % segment_k == 0"
    assert local_k % 2 == 1, "local pooling preserves L only for odd local_k"
    assert 2 * (local_k // 2) < L, "local window must fit inside a sequence"

    mm_dtype = jnp.dtype(matmul_dtype) if matmul_dtype is not None else x.dtype
    fused = (d % 128 == 0)
    # TODO(synk): for d not a multiple of 128, zero-pad the feature dim at the
    # wrapper so every op stays lane-dense instead of using the per-head path.
    if fused:
        Wk = W.astype(mm_dtype)                                       # (d, 6d)
        bk = b.astype(jnp.float32)                                    # (1, 6d)
    else:
        Wk = W.reshape(d, 6, d).transpose(1, 0, 2).astype(mm_dtype)   # (6,d,d)
        bk = b.reshape(6, 1, d).astype(jnp.float32)                   # (6,1,d)

    cap = _vmem_capacity_bytes()
    weight_bytes = Wk.size * Wk.dtype.itemsize + bk.size * bk.dtype.itemsize
    NB = (block_b if block_b is not None else
          _pick_block_b(B, L, d, x.dtype.itemsize, x.dtype.itemsize,
                        cap, weight_bytes))
    assert B % NB == 0

    kernel = functools.partial(
        _ponet_kernel, d=d, L=L, NB=NB, local_k=local_k,
        segment_k=segment_k, fused=fused, matmul_dtype=mm_dtype)

    # Generation-aware VMEM request: ~80% of this chip's capacity — leaves
    # headroom on v7x (64 MiB) while unlocking large blocks on v5e/v6e past
    # the 16/32 MiB scoped defaults.
    vmem_limit = int(0.8 * cap)

    return pl.pallas_call(
        kernel,
        out_shape=jax.ShapeDtypeStruct((B, L, d), x.dtype),
        grid_spec=pltpu.PrefetchScalarGridSpec(
            num_scalar_prefetch=0,
            grid=(B // NB,),
            in_specs=[
                pl.BlockSpec((NB, L, d), lambda bi: (bi, 0, 0)),
                # Weights / bias: whole-array, grid-invariant, resident in
                # VMEM (single-buffered; no per-step re-DMA).
                pl.BlockSpec(memory_space=pltpu.MemorySpace.VMEM),
                pl.BlockSpec(memory_space=pltpu.MemorySpace.VMEM),
            ],
            out_specs=pl.BlockSpec((NB, L, d), lambda bi: (bi, 0, 0)),
        ),
        compiler_params=pltpu.CompilerParams(
            dimension_semantics=("parallel",),
            vmem_limit_bytes=vmem_limit),
    )(x, Wk, bk)


def ponet_ref(x, W, b, *, local_k, segment_k, matmul_dtype=None):
    """Plain-JAX reference mirroring the PyTorch forward.

    matmul_dtype lets the reference use the same reduced-precision MXU
    operands as the kernel so the comparison stays tight."""
    B, L, d = x.shape
    mm = jnp.dtype(matmul_dtype) if matmul_dtype is not None else x.dtype
    h = jnp.dot(x.astype(mm), W.astype(mm),
                preferred_element_type=jnp.float32) + b[0].astype(jnp.float32)
    hQ, hK, hV, hs, hl, ho = jnp.split(h, 6, axis=-1)
    g = jnp.mean(hQ, axis=1)                                  # (B, d)
    qk = jnp.einsum('bd,bld->bl', g, hK)
    attn = jax.nn.softmax(qk, axis=1)
    g_prime = jnp.einsum('bl,bld->bd', attn, hV)
    g_out = g_prime[:, None, :] * ho
    n_seg = L // segment_k
    seg = hs.reshape(B, n_seg, segment_k, d).max(axis=2)
    s = jnp.repeat(seg, segment_k, axis=1)
    s_out = s * ho
    p = local_k // 2
    hl_pad = jnp.pad(hl, ((0, 0), (p, p), (0, 0)), constant_values=-jnp.inf)
    l_out = hl_pad[:, 0:L, :]
    for j in range(1, local_k):
        l_out = jnp.maximum(l_out, hl_pad[:, j:j + L, :])
    return (g_out + s_out + l_out).astype(x.dtype)


if __name__ == "__main__":
    # d is a multiple of 128 -> lane-dense activations, fused single-dot fc.
    B, L, d = 4, 8, 128
    local_k, segment_k = 3, 4

    key = jax.random.PRNGKey(0)
    kx, kw, kb = jax.random.split(key, 3)
    x = jax.random.normal(kx, (B, L, d), dtype=jnp.float32)
    # PyTorch Linear weight (6d, d) is applied as x @ W.T + b; build W=(d, 6d).
    W = 0.1 * jax.random.normal(kw, (d, 6 * d), dtype=jnp.float32)
    b = 0.1 * jax.random.normal(kb, (1, 6 * d), dtype=jnp.float32)

    out = ponet_block(x, W, b, local_k=local_k, segment_k=segment_k)
    out = jax.block_until_ready(out)

    # Reference uses the same bf16 MXU operands (f32 accumulation, f32
    # elementwise), and the kernel now uses an exact softmax divide, so the
    # comparison tolerance can stay tight.
    ref = ponet_ref(x, W, b, local_k=local_k, segment_k=segment_k,
                    matmul_dtype=jnp.bfloat16)
    assert out.shape == (B, L, d)
    assert jnp.allclose(out, ref, atol=2e-3, rtol=2e-3), "mismatch vs reference"

    print("KERNEL_OK")
</pallas_src>

<mosaic_0001>
module attributes {stable_mosaic.version = 11 : i64} {
  func.func @_ponet_kernel(%arg0: i32, %arg1: memref<1x8x128xf32, #tpu.memory_space<vmem>>, %arg2: memref<128x768xbf16, #tpu.memory_space<vmem>>, %arg3: memref<1x768xf32, #tpu.memory_space<vmem>>, %arg4: memref<1x8x128xf32, #tpu.memory_space<vmem>>) attributes {dimension_semantics = [#tpu.dimension_semantics<parallel>], iteration_bounds = array<i64: 4>, scalar_prefetch = 0 : i64, scratch_operands = 0 : i64, tpu.core_type = #tpu.core_type<tc>, window_params = [{transform_indices = @transform_0, window_bounds = array<i64: 1, 8, 128>}, {pipeline_mode = #tpu.pipeline_mode<synchronous>, transform_indices = @transform_1, window_bounds = array<i64: 128, 768>}, {pipeline_mode = #tpu.pipeline_mode<synchronous>, transform_indices = @transform_2, window_bounds = array<i64: 1, 768>}, {transform_indices = @transform_3, window_bounds = array<i64: 1, 8, 128>}]} {
    %c0 = arith.constant 0 : index
    %c0_0 = arith.constant 0 : index
    %c0_1 = arith.constant 0 : index
    %0 = vector.load %arg1[%c0, %c0_0, %c0_1] : memref<1x8x128xf32, #tpu.memory_space<vmem>>, vector<1x8x128xf32>
    %1 = vector.shape_cast %0 : vector<1x8x128xf32> to vector<8x128xf32>
    %2 = arith.truncf %1 : vector<8x128xf32> to vector<8x128xbf16>
    %c0_2 = arith.constant 0 : index
    %c0_3 = arith.constant 0 : index
    %3 = vector.load %arg2[%c0_2, %c0_3] : memref<128x768xbf16, #tpu.memory_space<vmem>>, vector<128x768xbf16>
    %cst = arith.constant dense<0.000000e+00> : vector<8x768xf32>
    %4 = tpu.matmul %2, %3, %cst {dimension_numbers = #tpu.dot_dimension_numbers<[1], [0], [0], [1], [0, 0, 1, 1], [], []>} : vector<8x128xbf16>, vector<128x768xbf16>, vector<8x768xf32> -> vector<8x768xf32>
    %c0_4 = arith.constant 0 : index
    %c0_5 = arith.constant 0 : index
    %5 = vector.load %arg3[%c0_4, %c0_5] : memref<1x768xf32, #tpu.memory_space<vmem>>, vector<1x768xf32>
    %6 = vector.broadcast %5 : vector<1x768xf32> to vector<8x768xf32>
    %7 = arith.addf %4, %6 : vector<8x768xf32>
    %8 = vector.extract_strided_slice %7 {offsets = [0, 0], sizes = [8, 128], strides = [1, 1]} : vector<8x768xf32> to vector<8x128xf32>
    %9 = vector.extract_strided_slice %7 {offsets = [0, 128], sizes = [8, 128], strides = [1, 1]} : vector<8x768xf32> to vector<8x128xf32>
    %10 = vector.extract_strided_slice %7 {offsets = [0, 256], sizes = [8, 128], strides = [1, 1]} : vector<8x768xf32> to vector<8x128xf32>
    %11 = vector.extract_strided_slice %7 {offsets = [0, 384], sizes = [8, 128], strides = [1, 1]} : vector<8x768xf32> to vector<8x128xf32>
    %12 = vector.extract_strided_slice %7 {offsets = [0, 512], sizes = [8, 128], strides = [1, 1]} : vector<8x768xf32> to vector<8x128xf32>
    %13 = vector.extract_strided_slice %7 {offsets = [0, 640], sizes = [8, 128], strides = [1, 1]} : vector<8x768xf32> to vector<8x128xf32>
    %14 = vector.shape_cast %8 : vector<8x128xf32> to vector<1x8x128xf32>
    %15 = vector.shape_cast %9 : vector<8x128xf32> to vector<1x8x128xf32>
    %16 = vector.shape_cast %10 : vector<8x128xf32> to vector<1x8x128xf32>
    %17 = vector.shape_cast %13 : vector<8x128xf32> to vector<1x8x128xf32>
    %cst_6 = arith.constant dense<0.000000e+00> : vector<1x128xf32>
    %18 = vector.multi_reduction <add>, %14, %cst_6 [1] : vector<1x8x128xf32> to vector<1x128xf32>
    %19 = vector.shape_cast %18 : vector<1x128xf32> to vector<1x1x128xf32>
    %cst_7 = arith.constant 8.000000e+00 : f32
    %20 = vector.broadcast %cst_7 : f32 to vector<1x1x128xf32>
    %21 = arith.divf %19, %20 : vector<1x1x128xf32>
    %22 = vector.broadcast %21 : vector<1x1x128xf32> to vector<1x8x128xf32>
    %23 = arith.mulf %15, %22 : vector<1x8x128xf32>
    %cst_8 = arith.constant dense<0.000000e+00> : vector<1x8xf32>
    %24 = vector.multi_reduction <add>, %23, %cst_8 [2] : vector<1x8x128xf32> to vector<1x8xf32>
    %25 = vector.shape_cast %24 : vector<1x8xf32> to vector<1x8x1xf32>
    %cst_9 = arith.constant dense<0xFF800000> : vector<1x1xf32>
    %26 = vector.multi_reduction <maximumf>, %25, %cst_9 [1] : vector<1x8x1xf32> to vector<1x1xf32>
    %27 = vector.shape_cast %26 : vector<1x1xf32> to vector<1x1x1xf32>
    %28 = vector.broadcast %27 : vector<1x1x1xf32> to vector<1x8x1xf32>
    %29 = arith.subf %25, %28 : vector<1x8x1xf32>
    %30 = math.exp %29 : vector<1x8x1xf32>
    %cst_10 = arith.constant dense<0.000000e+00> : vector<1x1xf32>
    %31 = vector.multi_reduction <add>, %30, %cst_10 [1] : vector<1x8x1xf32> to vector<1x1xf32>
    %32 = vector.shape_cast %31 : vector<1x1xf32> to vector<1x1x1xf32>
    %33 = vector.broadcast %32 : vector<1x1x1xf32> to vector<1x8x1xf32>
    %34 = arith.divf %30, %33 : vector<1x8x1xf32>
    %35 = vector.broadcast %34 : vector<1x8x1xf32> to vector<1x8x128xf32>
    %36 = arith.mulf %35, %16 : vector<1x8x128xf32>
    %cst_11 = arith.constant dense<0.000000e+00> : vector<1x128xf32>
    %37 = vector.multi_reduction <add>, %36, %cst_11 [1] : vector<1x8x128xf32> to vector<1x128xf32>
    %38 = vector.shape_cast %37 : vector<1x128xf32> to vector<1x1x128xf32>
    %39 = vector.broadcast %38 : vector<1x1x128xf32> to vector<1x8x128xf32>
    %40 = arith.mulf %39, %17 : vector<1x8x128xf32>
    %41 = vector.shape_cast %40 : vector<1x8x128xf32> to vector<8x128xf32>
    %42 = tpu.iota {dimensions = array<i32: 0>} : vector<8x128xi32>
    %c8_i32 = arith.constant 8 : i32
    %c0_i32 = arith.constant 0 : i32
    %43 = arith.cmpi eq, %c8_i32, %c0_i32 : i32
    %c1_i32 = arith.constant 1 : i32
    %44 = arith.select %43, %c1_i32, %c8_i32 : i32
    %45 = vector.broadcast %44 : i32 to vector<8x128xi32>
    %46 = arith.remsi %42, %45 : vector<8x128xi32>
    %c0_i32_12 = arith.constant 0 : i32
    %47 = vector.broadcast %c0_i32_12 : i32 to vector<8x128xi32>
    %48 = arith.cmpi ne, %46, %47 : vector<8x128xi32>
    %c0_i32_13 = arith.constant 0 : i32
    %49 = vector.broadcast %c0_i32_13 : i32 to vector<8x128xi32>
    %50 = arith.cmpi slt, %46, %49 : vector<8x128xi32>
    %c0_i32_14 = arith.constant 0 : i32
    %51 = arith.cmpi slt, %44, %c0_i32_14 : i32
    %52 = vector.broadcast %51 : i1 to vector<8x128xi1>
    %53 = vector.broadcast %52 : vector<8x128xi1> to vector<8x128xi1>
    %54 = arith.xori %50, %53 : vector<8x128xi1>
    %55 = arith.andi %54, %48 : vector<8x128xi1>
    %56 = vector.broadcast %44 : i32 to vector<8x128xi32>
    %57 = arith.addi %46, %56 : vector<8x128xi32>
    %58 = arith.select %55, %57, %46 : vector<8x128xi1>, vector<8x128xi32>
    %c4_i32 = arith.constant 4 : i32
    %c0_i32_15 = arith.constant 0 : i32
    %59 = arith.cmpi eq, %c4_i32, %c0_i32_15 : i32
    %c1_i32_16 = arith.constant 1 : i32
    %60 = arith.select %59, %c1_i32_16, %c4_i32 : i32
    %61 = vector.broadcast %60 : i32 to vector<8x128xi32>
    %62 = arith.remsi %42, %61 : vector<8x128xi32>
    %c0_i32_17 = arith.constant 0 : i32
    %63 = vector.broadcast %c0_i32_17 : i32 to vector<8x128xi32>
    %64 = arith.cmpi ne, %62, %63 : vector<8x128xi32>
    %c0_i32_18 = arith.constant 0 : i32
    %65 = vector.broadcast %c0_i32_18 : i32 to vector<8x128xi32>
    %66 = arith.cmpi slt, %62, %65 : vector<8x128xi32>
    %c0_i32_19 = arith.constant 0 : i32
    %67 = arith.cmpi slt, %60, %c0_i32_19 : i32
    %68 = vector.broadcast %67 : i1 to vector<8x128xi1>
    %69 = vector.broadcast %68 : vector<8x128xi1> to vector<8x128xi1>
    %70 = arith.xori %66, %69 : vector<8x128xi1>
    %71 = arith.andi %70, %64 : vector<8x128xi1>
    %72 = vector.broadcast %60 : i32 to vector<8x128xi32>
    %73 = arith.addi %62, %72 : vector<8x128xi32>
    %74 = arith.select %71, %73, %62 : vector<8x128xi1>, vector<8x128xi32>
    %c1_i32_20 = arith.constant 1 : i32
    %75 = tpu.dynamic_rotate %11 by %c1_i32_20 dim 0 : vector<8x128xf32>, i32 -> vector<8x128xf32>
    %c7_i32 = arith.constant 7 : i32
    %76 = tpu.dynamic_rotate %11 by %c7_i32 dim 0 : vector<8x128xf32>, i32 -> vector<8x128xf32>
    %c1_i32_21 = arith.constant 1 : i32
    %77 = vector.broadcast %c1_i32_21 : i32 to vector<8x128xi32>
    %78 = arith.cmpi sge, %74, %77 : vector<8x128xi32>
    %cst_22 = arith.constant 0xFF800000 : f32
    %79 = vector.broadcast %cst_22 : f32 to vector<8x128xf32>
    %80 = arith.select %78, %75, %79 : vector<8x128xi1>, vector<8x128xf32>
    %81 = arith.maximumf %11, %80 : vector<8x128xf32>
    %c2_i32 = arith.constant 2 : i32
    %82 = vector.broadcast %c2_i32 : i32 to vector<8x128xi32>
    %83 = arith.cmpi sle, %74, %82 : vector<8x128xi32>
    %cst_23 = arith.constant 0xFF800000 : f32
    %84 = vector.broadcast %cst_23 : f32 to vector<8x128xf32>
    %85 = arith.select %83, %76, %84 : vector<8x128xi1>, vector<8x128xf32>
    %86 = arith.maximumf %81, %85 : vector<8x128xf32>
    %c2_i32_24 = arith.constant 2 : i32
    %87 = tpu.dynamic_rotate %86 by %c2_i32_24 dim 0 : vector<8x128xf32>, i32 -> vector<8x128xf32>
    %c6_i32 = arith.constant 6 : i32
    %88 = tpu.dynamic_rotate %86 by %c6_i32 dim 0 : vector<8x128xf32>, i32 -> vector<8x128xf32>
    %c2_i32_25 = arith.constant 2 : i32
    %89 = vector.broadcast %c2_i32_25 : i32 to vector<8x128xi32>
    %90 = arith.cmpi sge, %74, %89 : vector<8x128xi32>
    %cst_26 = arith.constant 0xFF800000 : f32
    %91 = vector.broadcast %cst_26 : f32 to vector<8x128xf32>
    %92 = arith.select %90, %87, %91 : vector<8x128xi1>, vector<8x128xf32>
    %93 = arith.maximumf %86, %92 : vector<8x128xf32>
    %c1_i32_27 = arith.constant 1 : i32
    %94 = vector.broadcast %c1_i32_27 : i32 to vector<8x128xi32>
    %95 = arith.cmpi sle, %74, %94 : vector<8x128xi32>
    %cst_28 = arith.constant 0xFF800000 : f32
    %96 = vector.broadcast %cst_28 : f32 to vector<8x128xf32>
    %97 = arith.select %95, %88, %96 : vector<8x128xi1>, vector<8x128xf32>
    %98 = arith.maximumf %93, %97 : vector<8x128xf32>
    %99 = arith.mulf %98, %13 : vector<8x128xf32>
    %c1_i32_29 = arith.constant 1 : i32
    %100 = tpu.dynamic_rotate %12 by %c1_i32_29 dim 0 : vector<8x128xf32>, i32 -> vector<8x128xf32>
    %c7_i32_30 = arith.constant 7 : i32
    %101 = tpu.dynamic_rotate %12 by %c7_i32_30 dim 0 : vector<8x128xf32>, i32 -> vector<8x128xf32>
    %c1_i32_31 = arith.constant 1 : i32
    %102 = vector.broadcast %c1_i32_31 : i32 to vector<8x128xi32>
    %103 = arith.cmpi sge, %58, %102 : vector<8x128xi32>
    %cst_32 = arith.constant 0xFF800000 : f32
    %104 = vector.broadcast %cst_32 : f32 to vector<8x128xf32>
    %105 = arith.select %103, %100, %104 : vector<8x128xi1>, vector<8x128xf32>
    %106 = arith.maximumf %12, %105 : vector<8x128xf32>
    %c6_i32_33 = arith.constant 6 : i32
    %107 = vector.broadcast %c6_i32_33 : i32 to vector<8x128xi32>
    %108 = arith.cmpi sle, %58, %107 : vector<8x128xi32>
    %cst_34 = arith.constant 0xFF800000 : f32
    %109 = vector.broadcast %cst_34 : f32 to vector<8x128xf32>
    %110 = arith.select %108, %101, %109 : vector<8x128xi1>, vector<8x128xf32>
    %111 = arith.maximumf %106, %110 : vector<8x128xf32>
    %112 = arith.addf %41, %99 : vector<8x128xf32>
    %113 = arith.addf %112, %111 : vector<8x128xf32>
    %114 = vector.shape_cast %113 : vector<8x128xf32> to vector<1x8x128xf32>
    %c0_35 = arith.constant 0 : index
    %c0_36 = arith.constant 0 : index
    %c0_37 = arith.constant 0 : index
    %115 = vector.load %arg4[%c0_35, %c0_36, %c0_37] : memref<1x8x128xf32, #tpu.memory_space<vmem>>, vector<1x8x128xf32>
    tpu.vector_store %arg4[%c0_35, %c0_36, %c0_37], %114 {strides = array<i32>} : memref<1x8x128xf32, #tpu.memory_space<vmem>>, vector<1x8x128xf32>,
    return
  }
  func.func @transform_0(%arg0: i32) -> (i32, i32, i32) {
    %c0_i32 = arith.constant 0 : i32
    %c0_i32_0 = arith.constant 0 : i32
    %c0_i32_1 = arith.constant 0 : i32
    return %arg0, %c0_i32, %c0_i32_0 : i32, i32, i32
  }
  func.func @transform_1(%arg0: i32) -> (i32, i32) {
    %c0_i32 = arith.constant 0 : i32
    %c0_i32_0 = arith.constant 0 : i32
    %c0_i32_1 = arith.constant 0 : i32
    return %c0_i32, %c0_i32_0 : i32, i32
  }
  func.func @transform_2(%arg0: i32) -> (i32, i32) {
    %c0_i32 = arith.constant 0 : i32
    %c0_i32_0 = arith.constant 0 : i32
    %c0_i32_1 = arith.constant 0 : i32
    return %c0_i32, %c0_i32_0 : i32, i32
  }
  func.func @transform_3(%arg0: i32) -> (i32, i32, i32) {
    %c0_i32 = arith.constant 0 : i32
    %c0_i32_0 = arith.constant 0 : i32
    %c0_i32_1 = arith.constant 0 : i32
    return %arg0, %c0_i32, %c0_i32_0 : i32, i32, i32
  }
}

</mosaic_0001>

<llo_original>
// kernel: tpu_custom_call.1
$region0: #{tpu_custom_call.1}
  #allocation0 [shape = 'u32[]', space=smem, size = 0x4, offset = 0x4, fixed_abs, tag = 'smem constant byte address 0x4 - core index']
  #allocation1 [shape = 'u32[144,128]{1,0:T(1,128)}', space=vmem, size = 0x12000, scoped, tag = 'internal scratch']
  %s0 = inlined_call_operand.hbm [shape: f32[4,8,128], index: 0, kind: input, shape index: {}]
  %s1 = inlined_call_operand.hbm [shape: bf16[128,768], index: 1, kind: input, shape index: {}]
  %s2 = inlined_call_operand.vmem [shape: f32[1,768], index: 2, kind: input, shape index: {}]
  %s3 = inlined_call_operand.hbm [shape: f32[4,8,128], index: 3, kind: output, shape index: {}]
  %s4 = sld [smem:[#allocation0]]
  $region53: #{tpu_custom_call.1} parent=0
    _
  %s6 = ssub.s32 1, %s4
  %s7 = scalar_select 0, %s6, %s4
  $region1: #{tpu_custom_call.1} parent=0
    #allocation2 [shape = 'u8[8192]{0}', space=vmem, size = 0x2000, scoped, tag = 'input window, operand 0']
    #allocation3 [shape = 's32[2]{0}', space=sflag, size = 0x8, scoped, tag = 'scoped memory for tpu_custom_call.1']
    #allocation4 [shape = 's32[2]{0}', space=sflag, size = 0x8, scoped, tag = 'scoped memory for tpu_custom_call.1']
    #allocation5 [shape = 'u8[196608]{0}', space=vmem, size = 0x30000, scoped, tag = 'input window, operand 1, single buffered']
    #allocation6 [shape = 's32[1]{0}', space=sflag, size = 0x4, scoped, tag = 'scoped memory for tpu_custom_call.1']
    #allocation7 [shape = 'u8[8192]{0}', space=vmem, size = 0x2000, scoped, tag = 'output window, operand 0']
    %8 = vsyncpa [#allocation3], 0
    %s9 = scalar_lea.sflag [#allocation3], 1
    %10 = vsyncpa %s9, 0
    %11 = vsyncpa [#allocation6], 0
    %12 = vsyncpa [#allocation4], 0
    %s13 = scalar_lea.sflag [#allocation4], 1
    %14 = vsyncpa %s13, 0
    loop: start=0, step=1, limit=6
    $region2: #{tpu_custom_call.1} parent=1 // loop_pre_header
      _
    $region3: #{tpu_custom_call.1} parent=1 // loop_header
      %s16 = sphi 0, %s20
      %p17 = scmp.ge.s32.totalorder %s16, 6
      %s26 = sphi 0, %s28
      %s29 = sphi 0, %s26
      %s30 = sphi 0, %s29
      %s46 = sphi 0, %s30
      %s50 = sphi 0, %s50
      %s52 = sphi 0, %s50
      %s53 = sphi 0, %s52
      %s67 = sphi 0, %s53
      %s71 = sphi 0, %s71
      %s73 = sphi 0, %s71
      %s74 = sphi 0, %s73
      %s88 = sphi 0, %s74
      %s94 = sphi 0, %s96
      %s97 = sphi 0, %s94
      %s98 = sphi 0, %s97
      %s114 = sphi 0, %s98
    $region4: #{tpu_custom_call.1} parent=1 // loop_header_branch
      %19 = sbr.rel (%p17) target = $region8
    $region5: #{tpu_custom_call.1} parent=1 // loop_body
      %s21 = ssub.s32 %s16, 1
      %s22 = ssub.s32 %s16, 2
      %s23 = sadd.s32 %s16, 1
      %s24 = ssub.s32 %s16, %s23
      %p25 = scmp.eq.s32.totalorder %s24, 0
      %s27 = sadd.s32 %s26, 1
      %s28 = scalar_select %p25, %s26, %s27
      %p31 = pneg %p25
      %p32 = scmp.eq.s32.totalorder %s16, 3
      %p33 = por %p31, %p32
      %p34 = scmp.ne.s32.totalorder %s26, %s29
      %p35 = scmp.eq.s32.totalorder %s16, 0
      %p36 = por %p34, %p35
      %p37 = scmp.ne.s32.totalorder %s26, %s29
      %p38 = scmp.eq.s32.totalorder %s21, 3
      %p39 = por %p37, %p38
      %p40 = scmp.ne.s32.totalorder %s29, %s30
      %p41 = scmp.eq.s32.totalorder %s21, 0
      %p42 = por %p40, %p41
      %p43 = scmp.ne.s32.totalorder %s29, %s30
      %p44 = scmp.eq.s32.totalorder %s22, 3
      %p45 = por %p43, %p44
      %p47 = scmp.ne.s32.totalorder %s30, %s46
      %p48 = scmp.eq.s32.totalorder %s22, 0
      %p49 = por %p47, %p48
      %s51 = sadd.s32 %s50, 1
      %p54 = scmp.eq.s32.totalorder %s16, 3
      %p55 = scmp.ne.s32.totalorder %s50, %s52
      %p56 = scmp.eq.s32.totalorder %s16, 0
      %p57 = por %p55, %p56
      %p58 = scmp.ne.s32.totalorder %s50, %s52
      %p59 = scmp.eq.s32.totalorder %s21, 3
      %p60 = por %p58, %p59
      %p61 = scmp.ne.s32.totalorder %s52, %s53
      %p62 = scmp.eq.s32.totalorder %s21, 0
      %p63 = por %p61, %p62
      %p64 = scmp.ne.s32.totalorder %s52, %s53
      %p65 = scmp.eq.s32.totalorder %s22, 3
      %p66 = por %p64, %p65
      %p68 = scmp.ne.s32.totalorder %s53, %s67
      %p69 = scmp.eq.s32.totalorder %s22, 0
      %p70 = por %p68, %p69
      %s72 = sadd.s32 %s71, 1
      %p75 = scmp.eq.s32.totalorder %s16, 3
      %p76 = scmp.ne.s32.totalorder %s71, %s73
      %p77 = scmp.eq.s32.totalorder %s16, 0
      %p78 = por %p76, %p77
      %p79 = scmp.ne.s32.totalorder %s71, %s73
      %p80 = scmp.eq.s32.totalorder %s21, 3
      %p81 = por %p79, %p80
      %p82 = scmp.ne.s32.totalorder %s73, %s74
      %p83 = scmp.eq.s32.totalorder %s21, 0
      %p84 = por %p82, %p83
      %p85 = scmp.ne.s32.totalorder %s73, %s74
      %p86 = scmp.eq.s32.totalorder %s22, 3
      %p87 = por %p85, %p86
      %p89 = scmp.ne.s32.totalorder %s74, %s88
      %p90 = scmp.eq.s32.totalorder %s22, 0
      %p91 = por %p89, %p90
      %s92 = ssub.s32 %s16, %s23
      %p93 = scmp.eq.s32.totalorder %s92, 0
      %s95 = sadd.s32 %s94, 1
      %s96 = scalar_select %p93, %s94, %s95
      %p99 = pneg %p93
      %p100 = scmp.eq.s32.totalorder %s16, 3
      %p101 = por %p99, %p100
      %p102 = scmp.ne.s32.totalorder %s94, %s97
      %p103 = scmp.eq.s32.totalorder %s16, 0
      %p104 = por %p102, %p103
      %p105 = scmp.ne.s32.totalorder %s94, %s97
      %p106 = scmp.eq.s32.totalorder %s21, 3
      %p107 = por %p105, %p106
      %p108 = scmp.ne.s32.totalorder %s97, %s98
      %p109 = scmp.eq.s32.totalorder %s21, 0
      %p110 = por %p108, %p109
      %p111 = scmp.ne.s32.totalorder %s97, %s98
      %p112 = scmp.eq.s32.totalorder %s22, 3
      %p113 = por %p111, %p112
      %p115 = scmp.ne.s32.totalorder %s98, %s114
      %p116 = scmp.eq.s32.totalorder %s22, 0
      %p117 = por %p115, %p116
      %p118 = scmp.le.s32.totalorder 1, %s16
      %p119 = scmp.lt.s32.totalorder %s16, 5
      %p120 = pnand %p118, %p119
      %p121 = pneg %p120
      // Predicated region
      $region9: #{tpu_custom_call.1} parent=5 // pred_check
        _
      $region10: #{tpu_custom_call.1} parent=5 // pred_check_branch
        %123 = sbr.rel (%p120) target = $region12
      $region11: #{tpu_custom_call.1} parent=5 // pred_region
        %s124 = ssub.s32 %s16, 1
        // Predicated region
        $region13: #{tpu_custom_call.1} parent=11 // pred_check
          %p125 = pneg %p63
        $region14: #{tpu_custom_call.1} parent=11 // pred_check_branch
          %127 = sbr.rel (%p125) target = $region16
        $region15: #{tpu_custom_call.1} parent=11 // pred_region
          %s129 = ssub.s32 6144, 6144
          %130 = vsyncadd [#allocation6], %s129
          %s131 = sshll.u32 [#allocation5], 4
          %s132 = int_to_ptr.vmem [resolvable:$true] %s131
          %137 = dma.hbm_to_vmem [thread:$0]  %s1, 6144, %s132, [#allocation6], 384, 384, 24
        $region16: #{tpu_custom_call.1} parent=11 // pred_fallthru
          _
        // Predicated region
        $region17: #{tpu_custom_call.1} parent=11 // pred_check
          %p138 = pneg %p84
        $region18: #{tpu_custom_call.1} parent=11 // pred_check_branch
          %140 = sbr.rel (%p138) target = $region20
        $region19: #{tpu_custom_call.1} parent=11 // pred_region
          _
        $region20: #{tpu_custom_call.1} parent=11 // pred_fallthru
          _
      $region12: #{tpu_custom_call.1} parent=5 // pred_fallthru
        _
      %p141 = scmp.lt.s32.totalorder %s16, 4
      // Predicated region
      $region21: #{tpu_custom_call.1} parent=5 // pred_check
        %p142 = pneg %p141
      $region22: #{tpu_custom_call.1} parent=5 // pred_check_branch
        %144 = sbr.rel (%p142) target = $region24
      $region23: #{tpu_custom_call.1} parent=5 // pred_region
        // Predicated region
        $region25: #{tpu_custom_call.1} parent=23 // pred_check
          %p145 = pneg %p36
        $region26: #{tpu_custom_call.1} parent=23 // pred_check_branch
          %147 = sbr.rel (%p145) target = $region28
        $region27: #{tpu_custom_call.1} parent=23 // pred_region
          %s148 = sand.u32 %s26, 1
          %s149 = scalar_lea.sflag [#allocation3], %s148
          %s150 = sand.u32 %s26, 1
          %s151 = smul.addr %s150, 8
          %s152 = scalar_lea.vmem [#allocation2], %s151
          %s154 = ssub.s32 128, 128
          %155 = vsyncadd %s149, %s154
          %s156 = smul.addr %s16, 128
          %s157 = scalar_lea.hbm %s0, %s156
          %s159 = sshll.u32 %s152, 4
          %s160 = int_to_ptr.vmem [resolvable:$true] %s159
          %162 = dma.hbm_to_vmem [thread:$0]  %s157, 128, %s160, %s149
        $region28: #{tpu_custom_call.1} parent=23 // pred_fallthru
          _
      $region24: #{tpu_custom_call.1} parent=5 // pred_fallthru
        _
      %p163 = scmp.le.s32.totalorder 1, %s16
      %p164 = scmp.lt.s32.totalorder %s16, 5
      %p165 = pnand %p163, %p164
      %p166 = pneg %p165
      // Predicated region
      $region29: #{tpu_custom_call.1} parent=5 // pred_check
        _
      $region30: #{tpu_custom_call.1} parent=5 // pred_check_branch
        %168 = sbr.rel (%p165) target = $region32
      $region31: #{tpu_custom_call.1} parent=5 // pred_region
        %s169 = ssub.s32 %s16, 1
        %s170 = sand.u32 %s29, 1
        %s171 = scalar_lea.sflag [#allocation3], %s170
        %s172 = sand.u32 %s29, 1
        %s173 = smul.addr %s172, 8
        %s174 = scalar_lea.vmem [#allocation2], %s173
        // Predicated region
        $region33: #{tpu_custom_call.1} parent=31 // pred_check
          %p175 = pneg %p42
        $region34: #{tpu_custom_call.1} parent=31 // pred_check_branch
          %177 = sbr.rel (%p175) target = $region36
        $region35: #{tpu_custom_call.1} parent=31 // pred_region
          %178 = dma.done %s171, 128
        $region36: #{tpu_custom_call.1} parent=31 // pred_fallthru
          _
        // Predicated region
        $region37: #{tpu_custom_call.1} parent=31 // pred_check
          %p179 = pneg %p63
        $region38: #{tpu_custom_call.1} parent=31 // pred_check_branch
          %181 = sbr.rel (%p179) target = $region40
        $region39: #{tpu_custom_call.1} parent=31 // pred_region
          %182 = dma.done [#allocation6], 6144
        $region40: #{tpu_custom_call.1} parent=31 // pred_fallthru
          _
        %s183 = sand.u32 %s29, 1
        %s184 = scalar_lea.sflag [#allocation3], %s183
        %s185 = sand.u32 %s29, 1
        %s186 = smul.addr %s185, 8
        %s187 = scalar_lea.vmem [#allocation2], %s186
        %p188 = pneg %p42
        %p189 = pneg %p39
        %p190 = pneg %p63
        %p191 = pneg %p60
        %p192 = pneg %p84
        %p193 = pneg %p81
        %p194 = pneg %p110
        %p195 = pneg %p107
        %s196 = sand.u32 %s97, 1
        %s197 = scalar_lea.sflag [#allocation4], %s196
        %s198 = sand.u32 %s97, 1
        %s199 = smul.addr %s198, 8
        %s200 = scalar_lea.vmem [#allocation7], %s199
        %v202 = vld [vmem:[%s174] sm:$0xff]
        %v203 = vpack.c.bf16 %v202, %v202
        %v204 = vld [vmem:[#allocation5] sm:$0xff]
        %v205 = vld [vmem:[#allocation5 + $0x8] sm:$0xff]
        %v206 = vld [vmem:[#allocation5 + $0x10] sm:$0xff]
        %v207 = vld [vmem:[#allocation5 + $0x18] sm:$0xff]
        %v208 = vld [vmem:[#allocation5 + $0x20] sm:$0xff]
        %v209 = vld [vmem:[#allocation5 + $0x28] sm:$0xff]
        %v210 = vld [vmem:[#allocation5 + $0x30] sm:$0xff]
        %v211 = vld [vmem:[#allocation5 + $0x38] sm:$0xff]
        %v212 = vld [vmem:[#allocation5 + $0x40] sm:$0xff]
        %v213 = vld [vmem:[#allocation5 + $0x48] sm:$0xff]
        %v214 = vld [vmem:[#allocation5 + $0x50] sm:$0xff]
        %v215 = vld [vmem:[#allocation5 + $0x58] sm:$0xff]
        %v216 = vld [vmem:[#allocation5 + $0x60] sm:$0xff]
        %v217 = vld [vmem:[#allocation5 + $0x68] sm:$0xff]
        %v218 = vld [vmem:[#allocation5 + $0x70] sm:$0xff]
        %v219 = vld [vmem:[#allocation5 + $0x78] sm:$0xff]
        %v220 = vld [vmem:[#allocation5 + $0x80] sm:$0xff]
        %v221 = vld [vmem:[#allocation5 + $0x88] sm:$0xff]
        %v222 = vld [vmem:[#allocation5 + $0x90] sm:$0xff]
        %v223 = vld [vmem:[#allocation5 + $0x98] sm:$0xff]
        %v224 = vld [vmem:[#allocation5 + $0xa0] sm:$0xff]
        %v225 = vld [vmem:[#allocation5 + $0xa8] sm:$0xff]
        %v226 = vld [vmem:[#allocation5 + $0xb0] sm:$0xff]
        %v227 = vld [vmem:[#allocation5 + $0xb8] sm:$0xff]
        %v228 = vld [vmem:[#allocation5 + $0xc0] sm:$0xff]
        %v229 = vld [vmem:[#allocation5 + $0xc8] sm:$0xff]
        %v230 = vld [vmem:[#allocation5 + $0xd0] sm:$0xff]
        %v231 = vld [vmem:[#allocation5 + $0xd8] sm:$0xff]
        %v232 = vld [vmem:[#allocation5 + $0xe0] sm:$0xff]
        %v233 = vld [vmem:[#allocation5 + $0xe8] sm:$0xff]
        %v234 = vld [vmem:[#allocation5 + $0xf0] sm:$0xff]
        %v235 = vld [vmem:[#allocation5 + $0xf8] sm:$0xff]
        %v236 = vld [vmem:[#allocation5 + $0x100] sm:$0xff]
        %v237 = vld [vmem:[#allocation5 + $0x108] sm:$0xff]
        %v238 = vld [vmem:[#allocation5 + $0x110] sm:$0xff]
        %v239 = vld [vmem:[#allocation5 + $0x118] sm:$0xff]
        %v240 = vld [vmem:[#allocation5 + $0x120] sm:$0xff]
        %v241 = vld [vmem:[#allocation5 + $0x128] sm:$0xff]
        %v242 = vld [vmem:[#allocation5 + $0x130] sm:$0xff]
        %v243 = vld [vmem:[#allocation5 + $0x138] sm:$0xff]
        %v244 = vld [vmem:[#allocation5 + $0x140] sm:$0xff]
        %v245 = vld [vmem:[#allocation5 + $0x148] sm:$0xff]
        %v246 = vld [vmem:[#allocation5 + $0x150] sm:$0xff]
        %v247 = vld [vmem:[#allocation5 + $0x158] sm:$0xff]
        %v248 = vld [vmem:[#allocation5 + $0x160] sm:$0xff]
        %v249 = vld [vmem:[#allocation5 + $0x168] sm:$0xff]
        %v250 = vld [vmem:[#allocation5 + $0x170] sm:$0xff]
        %v251 = vld [vmem:[#allocation5 + $0x178] sm:$0xff]
        %v252 = vld [vmem:[%s2] sm:$0x3f]
        %v254 = vlaneseq
        %v255 = vshrl.u32 %v254, 7
        %v256 = vsub.s32 0, %v255
        %v257 = vrot.slane %v252, %v256
        %v258 = vlaneseq
        %v259 = vshrl.u32 %v258, 7
        %v260 = vsub.s32 1, %v259
        %v261 = vrot.slane %v252, %v260
        %v262 = vlaneseq
        %v263 = vshrl.u32 %v262, 7
        %v264 = vsub.s32 2, %v263
        %v265 = vrot.slane %v252, %v264
        %v266 = vlaneseq
        %v267 = vshrl.u32 %v266, 7
        %v268 = vsub.s32 3, %v267
        %v269 = vrot.slane %v252, %v268
        %v270 = vlaneseq
        %v271 = vshrl.u32 %v270, 7
        %v272 = vsub.s32 4, %v271
        %v273 = vrot.slane %v252, %v272
        %v274 = vlaneseq
        %v275 = vshrl.u32 %v274, 7
        %v276 = vsub.s32 5, %v275
        %v277 = vrot.slane %v252, %v276
        %v332 = vunpack.c.l.b16 %v204
        %v333 = vunpack.c.h.b16 %v204
        %v334 = vunpack.c.l.b16 %v205
        %v335 = vunpack.c.h.b16 %v205
        %v336 = vunpack.c.l.b16 %v206
        %v337 = vunpack.c.h.b16 %v206
        %v338 = vunpack.c.l.b16 %v207
        %v339 = vunpack.c.h.b16 %v207
        %v340 = vunpack.c.l.b16 %v208
        %v341 = vunpack.c.h.b16 %v208
        %v342 = vunpack.c.l.b16 %v209
        %v343 = vunpack.c.h.b16 %v209
        %v344 = vunpack.c.l.b16 %v210
        %v345 = vunpack.c.h.b16 %v210
        %v346 = vunpack.c.l.b16 %v211
        %v347 = vunpack.c.h.b16 %v211
        %v348 = vunpack.c.l.b16 %v212
        %v349 = vunpack.c.h.b16 %v212
        %v350 = vunpack.c.l.b16 %v213
        %v351 = vunpack.c.h.b16 %v213
        %v352 = vunpack.c.l.b16 %v214
        %v353 = vunpack.c.h.b16 %v214
        %v354 = vunpack.c.l.b16 %v215
        %v355 = vunpack.c.h.b16 %v215
        %v356 = vunpack.c.l.b16 %v216
        %v357 = vunpack.c.h.b16 %v216
        %v358 = vunpack.c.l.b16 %v217
        %v359 = vunpack.c.h.b16 %v217
        %v360 = vunpack.c.l.b16 %v218
        %v361 = vunpack.c.h.b16 %v218
        %v362 = vunpack.c.l.b16 %v219
        %v363 = vunpack.c.h.b16 %v219
        %v364 = vunpack.c.l.b16 %v220
        %v365 = vunpack.c.h.b16 %v220
        %v366 = vunpack.c.l.b16 %v221
        %v367 = vunpack.c.h.b16 %v221
        %v368 = vunpack.c.l.b16 %v222
        %v369 = vunpack.c.h.b16 %v222
        %v370 = vunpack.c.l.b16 %v223
        %v371 = vunpack.c.h.b16 %v223
        %v372 = vunpack.c.l.b16 %v224
        %v373 = vunpack.c.h.b16 %v224
        %v374 = vunpack.c.l.b16 %v225
        %v375 = vunpack.c.h.b16 %v225
        %v376 = vunpack.c.l.b16 %v226
        %v377 = vunpack.c.h.b16 %v226
        %v378 = vunpack.c.l.b16 %v227
        %v379 = vunpack.c.h.b16 %v227
        %v380 = vunpack.c.l.b16 %v228
        %v381 = vunpack.c.h.b16 %v228
        %v382 = vunpack.c.l.b16 %v229
        %v383 = vunpack.c.h.b16 %v229
        %v384 = vunpack.c.l.b16 %v230
        %v385 = vunpack.c.h.b16 %v230
        %v386 = vunpack.c.l.b16 %v231
        %v387 = vunpack.c.h.b16 %v231
        %v388 = vunpack.c.l.b16 %v232
        %v389 = vunpack.c.h.b16 %v232
        %v390 = vunpack.c.l.b16 %v233
        %v391 = vunpack.c.h.b16 %v233
        %v392 = vunpack.c.l.b16 %v234
        %v393 = vunpack.c.h.b16 %v234
        %v394 = vunpack.c.l.b16 %v235
        %v395 = vunpack.c.h.b16 %v235
        %v396 = vunpack.c.l.b16 %v236
        %v397 = vunpack.c.h.b16 %v236
        %v398 = vunpack.c.l.b16 %v237
        %v399 = vunpack.c.h.b16 %v237
        %v400 = vunpack.c.l.b16 %v238
        %v401 = vunpack.c.h.b16 %v238
        %v402 = vunpack.c.l.b16 %v239
        %v403 = vunpack.c.h.b16 %v239
        %v404 = vunpack.c.l.b16 %v240
        %v405 = vunpack.c.h.b16 %v240
        %v406 = vunpack.c.l.b16 %v241
        %v407 = vunpack.c.h.b16 %v241
        %v408 = vunpack.c.l.b16 %v242
        %v409 = vunpack.c.h.b16 %v242
        %v410 = vunpack.c.l.b16 %v243
        %v411 = vunpack.c.h.b16 %v243
        %v412 = vunpack.c.l.b16 %v244
        %v413 = vunpack.c.h.b16 %v244
        %v414 = vunpack.c.l.b16 %v245
        %v415 = vunpack.c.h.b16 %v245
        %v416 = vunpack.c.l.b16 %v246
        %v417 = vunpack.c.h.b16 %v246
        %v418 = vunpack.c.l.b16 %v247
        %v419 = vunpack.c.h.b16 %v247
        %v420 = vunpack.c.l.b16 %v248
        %v421 = vunpack.c.h.b16 %v248
        %v422 = vunpack.c.l.b16 %v249
        %v423 = vunpack.c.h.b16 %v249
        %v424 = vunpack.c.l.b16 %v250
        %v425 = vunpack.c.h.b16 %v250
        %v426 = vunpack.c.l.b16 %v251
        %v427 = vunpack.c.h.b16 %v251
        %v428 = vpack.c.b16 %v338, %v332
        %v429 = vpack.c.b16 %v339, %v333
        %v430 = vpack.c.b16 %v340, %v334
        %v431 = vpack.c.b16 %v341, %v335
        %v432 = vpack.c.b16 %v342, %v336
        %v433 = vpack.c.b16 %v343, %v337
        %v434 = vpack.c.b16 %v350, %v344
        %v435 = vpack.c.b16 %v351, %v345
        %v436 = vpack.c.b16 %v352, %v346
        %v437 = vpack.c.b16 %v353, %v347
        %v438 = vpack.c.b16 %v354, %v348
        %v439 = vpack.c.b16 %v355, %v349
        %v440 = vpack.c.b16 %v362, %v356
        %v441 = vpack.c.b16 %v363, %v357
        %v442 = vpack.c.b16 %v364, %v358
        %v443 = vpack.c.b16 %v365, %v359
        %v444 = vpack.c.b16 %v366, %v360
        %v445 = vpack.c.b16 %v367, %v361
        %v446 = vpack.c.b16 %v374, %v368
        %v447 = vpack.c.b16 %v375, %v369
        %v448 = vpack.c.b16 %v376, %v370
        %v449 = vpack.c.b16 %v377, %v371
        %v450 = vpack.c.b16 %v378, %v372
        %v451 = vpack.c.b16 %v379, %v373
        %v452 = vpack.c.b16 %v386, %v380
        %v453 = vpack.c.b16 %v387, %v381
        %v454 = vpack.c.b16 %v388, %v382
        %v455 = vpack.c.b16 %v389, %v383
        %v456 = vpack.c.b16 %v390, %v384
        %v457 = vpack.c.b16 %v391, %v385
        %v458 = vpack.c.b16 %v398, %v392
        %v459 = vpack.c.b16 %v399, %v393
        %v460 = vpack.c.b16 %v400, %v394
        %v461 = vpack.c.b16 %v401, %v395
        %v462 = vpack.c.b16 %v402, %v396
        %v463 = vpack.c.b16 %v403, %v397
        %v464 = vpack.c.b16 %v410, %v404
        %v465 = vpack.c.b16 %v411, %v405
        %v466 = vpack.c.b16 %v412, %v406
        %v467 = vpack.c.b16 %v413, %v407
        %v468 = vpack.c.b16 %v414, %v408
        %v469 = vpack.c.b16 %v415, %v409
        %v470 = vpack.c.b16 %v422, %v416
        %v471 = vpack.c.b16 %v423, %v417
        %v472 = vpack.c.b16 %v424, %v418
        %v473 = vpack.c.b16 %v425, %v419
        %v474 = vpack.c.b16 %v426, %v420
        %v475 = vpack.c.b16 %v427, %v421
        %524 = vmatprep.subr.bf16.mxu0 %v429
        %525 = vmatpush1.bf16.msra.mxu0 %v428
        %526 = vmatprep.subr.bf16.mxu0 %v435
        %527 = vmatpush1.bf16.msra.mxu0 %v434
        %528 = vmatprep.subr.bf16.mxu0 %v441
        %529 = vmatpush1.bf16.msra.mxu0 %v440
        %530 = vmatprep.subr.bf16.mxu0 %v447
        %531 = vmatpush1.bf16.msra.mxu0 %v446
        %532 = vmatprep.subr.bf16.mxu0 %v453
        %533 = vmatpush1.bf16.msra.mxu0 %v452
        %534 = vmatprep.subr.bf16.mxu0 %v459
        %535 = vmatpush1.bf16.msra.mxu0 %v458
        %536 = vmatprep.subr.bf16.mxu0 %v465
        %537 = vmatpush1.bf16.msra.mxu0 %v464
        %538 = vmatprep.subr.bf16.mxu0 %v471
        %539 = vmatpush1.bf16.msra.mxu0 %v470
        %540 = vmatprep.subr.bf16.mxu0 0
        %541 = vmatpush1.bf16.msra.mxu0 0
        %542 = vmatprep.subr.bf16.mxu0 0
        %543 = vmatpush1.bf16.msra.mxu0 0
        %544 = vmatprep.subr.bf16.mxu0 0
        %545 = vmatpush1.bf16.msra.mxu0 0
        %546 = vmatprep.subr.bf16.mxu0 0
        %547 = vmatpush1.bf16.msra.mxu0 0
        %548 = vmatprep.subr.bf16.mxu0 0
        %549 = vmatpush1.bf16.msra.mxu0 0
        %550 = vmatprep.subr.bf16.mxu0 0
        %551 = vmatpush1.bf16.msra.mxu0 0
        %552 = vmatprep.subr.bf16.mxu0 0
        %553 = vmatpush1.bf16.msra.mxu0 0
        %554 = vmatprep.subr.bf16.mxu0 0
        %555 = vmatpush1.bf16.msra.mxu0 0
        %556 = vmatprep.mubr.bf16.mxu0 0
        %557 = vmatmul.mubr.bf16.gmra.mrb[0].mxu0 %v203
        %v558 = vpop.f32.mrb[0].mxu0
        %v559 = vadd.f32 %v257, %v558
        %v560 = vpop.f32.mrb[0].mxu0
        %v561 = vadd.f32 %v261, %v560
        %v562 = vpop.f32.mrb[0].mxu0
        %v563 = vpop.f32.mrb[0].mxu0
        %564 = vdwg.mxu0
        %565 = vmatprep.subr.bf16.mxu0 %v431
        %566 = vmatpush1.bf16.msra.mxu0 %v430
        %567 = vmatprep.subr.bf16.mxu0 %v437
        %568 = vmatpush1.bf16.msra.mxu0 %v436
        %569 = vmatprep.subr.bf16.mxu0 %v443
        %570 = vmatpush1.bf16.msra.mxu0 %v442
        %571 = vmatprep.subr.bf16.mxu0 %v449
        %572 = vmatpush1.bf16.msra.mxu0 %v448
        %573 = vmatprep.subr.bf16.mxu0 %v455
        %574 = vmatpush1.bf16.msra.mxu0 %v454
        %575 = vmatprep.subr.bf16.mxu0 %v461
        %576 = vmatpush1.bf16.msra.mxu0 %v460
        %577 = vmatprep.subr.bf16.mxu0 %v467
        %578 = vmatpush1.bf16.msra.mxu0 %v466
        %579 = vmatprep.subr.bf16.mxu0 %v473
        %580 = vmatpush1.bf16.msra.mxu0 %v472
        %581 = vmatprep.subr.bf16.mxu0 0
        %582 = vmatpush1.bf16.msra.mxu0 0
        %583 = vmatprep.subr.bf16.mxu0 0
        %584 = vmatpush1.bf16.msra.mxu0 0
        %585 = vmatprep.subr.bf16.mxu0 0
        %586 = vmatpush1.bf16.msra.mxu0 0
        %587 = vmatprep.subr.bf16.mxu0 0
        %588 = vmatpush1.bf16.msra.mxu0 0
        %589 = vmatprep.subr.bf16.mxu0 0
        %590 = vmatpush1.bf16.msra.mxu0 0
        %591 = vmatprep.subr.bf16.mxu0 0
        %592 = vmatpush1.bf16.msra.mxu0 0
        %593 = vmatprep.subr.bf16.mxu0 0
        %594 = vmatpush1.bf16.msra.mxu0 0
        %595 = vmatprep.subr.bf16.mxu0 0
        %596 = vmatpush1.bf16.msra.mxu0 0
        %597 = vmatprep.mubr.bf16.mxu0 0
        %598 = vmatmul.mubr.bf16.gmra.mrb[0].mxu0 %v203
        %v599 = vpop.f32.mrb[0].mxu0
        %v600 = vadd.f32 %v265, %v599
        %v601 = vpop.f32.mrb[0].mxu0
        %v602 = vadd.f32 %v269, %v601
        %v603 = vpop.f32.mrb[0].mxu0
        %v604 = vpop.f32.mrb[0].mxu0
        %605 = vdwg.mxu0
        %606 = vmatprep.subr.bf16.mxu0 %v433
        %607 = vmatpush1.bf16.msra.mxu0 %v432
        %608 = vmatprep.subr.bf16.mxu0 %v439
        %609 = vmatpush1.bf16.msra.mxu0 %v438
        %610 = vmatprep.subr.bf16.mxu0 %v445
        %611 = vmatpush1.bf16.msra.mxu0 %v444
        %612 = vmatprep.subr.bf16.mxu0 %v451
        %613 = vmatpush1.bf16.msra.mxu0 %v450
        %614 = vmatprep.subr.bf16.mxu0 %v457
        %615 = vmatpush1.bf16.msra.mxu0 %v456
        %616 = vmatprep.subr.bf16.mxu0 %v463
        %617 = vmatpush1.bf16.msra.mxu0 %v462
        %618 = vmatprep.subr.bf16.mxu0 %v469
        %619 = vmatpush1.bf16.msra.mxu0 %v468
        %620 = vmatprep.subr.bf16.mxu0 %v475
        %621 = vmatpush1.bf16.msra.mxu0 %v474
        %622 = vmatprep.subr.bf16.mxu0 0
        %623 = vmatpush1.bf16.msra.mxu0 0
        %624 = vmatprep.subr.bf16.mxu0 0
        %625 = vmatpush1.bf16.msra.mxu0 0
        %626 = vmatprep.subr.bf16.mxu0 0
        %627 = vmatpush1.bf16.msra.mxu0 0
        %628 = vmatprep.subr.bf16.mxu0 0
        %629 = vmatpush1.bf16.msra.mxu0 0
        %630 = vmatprep.subr.bf16.mxu0 0
        %631 = vmatpush1.bf16.msra.mxu0 0
        %632 = vmatprep.subr.bf16.mxu0 0
        %633 = vmatpush1.bf16.msra.mxu0 0
        %634 = vmatprep.subr.bf16.mxu0 0
        %635 = vmatpush1.bf16.msra.mxu0 0
        %636 = vmatprep.subr.bf16.mxu0 0
        %637 = vmatpush1.bf16.msra.mxu0 0
        %638 = vmatprep.mubr.bf16.mxu0 0
        %639 = vmatmul.mubr.bf16.gmra.mrb[0].mxu0 %v203
        %v640 = vpop.f32.mrb[0].mxu0
        %v641 = vadd.f32 %v273, %v640
        %v642 = vpop.f32.mrb[0].mxu0
        %v643 = vadd.f32 %v277, %v642
        %v644 = vpop.f32.mrb[0].mxu0
        %v645 = vpop.f32.mrb[0].mxu0
        %646 = vdwg.mxu0
        %v647 = vrot.slane %v559, 4
        %v648 = vadd.f32 %v559, %v647
        %v649 = vrot.slane %v648, 2
        %v650 = vadd.f32 %v648, %v649
        %v651 = vrot.slane %v650, 1
        %v652 = vadd.f32 %v650, %v651
        %v653 = vrcp.pop 8.0
        %v654 = vmul.f32 %v652, %v653
        %v655 = vmul.f32 %v561, %v654
        %656 = vadd.xlane.f32.xlu0 %v655
        %v657 = vpop.xlane.xlu0 %656
        %v658 = vrot.slane %v657, 4
        %v659 = vmax.f32 %v657, %v658
        %v660 = vrot.slane %v659, 2
        %v661 = vmax.f32 %v659, %v660
        %v662 = vrot.slane %v661, 1
        %v663 = vmax.f32 %v661, %v662
        %v664 = vsub.f32 %v657, %v663
        %v665 = vmul.f32 %v664, 1.442695
        %v666 = vpow.pop %v665
        %v667 = vrot.slane %v666, 4
        %v668 = vadd.f32 %v666, %v667
        %v669 = vrot.slane %v668, 2
        %v670 = vadd.f32 %v668, %v669
        %v671 = vrot.slane %v670, 1
        %v672 = vadd.f32 %v670, %v671
        %v673 = vrcp.pop %v672
        %v674 = vmul.f32 %v666, %v673
        %v675 = vmul.f32 %v674, %v600
        %v676 = vrot.slane %v675, 4
        %v677 = vadd.f32 %v675, %v676
        %v678 = vrot.slane %v677, 2
        %v679 = vadd.f32 %v677, %v678
        %v680 = vrot.slane %v679, 1
        %v681 = vadd.f32 %v679, %v680
        %v682 = vmul.f32 %v681, %v643
        %v683 = vlaneseq
        %v684 = vshrl.u32 %v683, 7
        %vm685 = vcmp.lt.s32.totalorder %v684, 0
        %v686 = vsub.s32 0, %v684
        %v687 = vsel %vm685, %v686, %v684
        %v688 = vshrl.u32 %v687, 3
        %v689 = vand.u32 %v687, 7
        %v690 = vsub.s32 0, %v689
        %v691 = vsel %vm685, %v690, %v689
        %vm692 = vcmp.ne.s32.totalorder %v691, 0
        %vm693 = vcmp.lt.s32.totalorder %v691, 0
        %vm694 = vmand %vm693, %vm692
        %v695 = vadd.s32 %v691, 8
        %v696 = vsel %vm694, %v695, %v691
        %vm697 = vcmp.lt.s32.totalorder %v684, 0
        %v698 = vsub.s32 0, %v684
        %v699 = vsel %vm697, %v698, %v684
        %v700 = vshrl.u32 %v699, 2
        %v701 = vand.u32 %v699, 3
        %v702 = vsub.s32 0, %v701
        %v703 = vsel %vm697, %v702, %v701
        %vm704 = vcmp.ne.s32.totalorder %v703, 0
        %vm705 = vcmp.lt.s32.totalorder %v703, 0
        %vm706 = vmand %vm705, %vm704
        %v707 = vadd.s32 %v703, 4
        %v708 = vsel %vm706, %v707, %v703
        %v709 = vrot.slane %v602, 7
        %v710 = vrot.slane %v602, 1
        %vm711 = vcmp.ge.s32.totalorder %v708, 1
        %v712 = vsel %vm711, %v709, -inf
        %v713 = vmax.f32 %v602, %v712
        %vm714 = vcmp.le.s32.totalorder %v708, 2
        %v715 = vsel %vm714, %v710, -inf
        %v716 = vmax.f32 %v713, %v715
        %v717 = vrot.slane %v716, 6
        %v718 = vrot.slane %v716, 2
        %vm719 = vcmp.ge.s32.totalorder %v708, 2
        %v720 = vsel %vm719, %v717, -inf
        %v721 = vmax.f32 %v716, %v720
        %vm722 = vcmp.le.s32.totalorder %v708, 1
        %v723 = vsel %vm722, %v718, -inf
        %v724 = vmax.f32 %v721, %v723
        %v725 = vmul.f32 %v724, %v643
        %v726 = vrot.slane %v641, 7
        %v727 = vrot.slane %v641, 1
        %vm728 = vcmp.ge.s32.totalorder %v696, 1
        %v729 = vsel %vm728, %v726, -inf
        %v730 = vmax.f32 %v641, %v729
        %vm731 = vcmp.le.s32.totalorder %v696, 6
        %v732 = vsel %vm731, %v727, -inf
        %v733 = vmax.f32 %v730, %v732
        %v734 = vadd.f32 %v682, %v725
        %v735 = vadd.f32 %v734, %v733
        %736 = vst [vmem:[%s200] sm:$0xff] %v735
        %s737 = sand.u32 %s97, 1
        %s738 = scalar_lea.sflag [#allocation4], %s737
        %s739 = sand.u32 %s97, 1
        %s740 = smul.addr %s739, 8
        %s741 = scalar_lea.vmem [#allocation7], %s740
        // Predicated region
        $region41: #{tpu_custom_call.1} parent=31 // pred_check
          %p742 = pneg %p107
        $region42: #{tpu_custom_call.1} parent=31 // pred_check_branch
          %744 = sbr.rel (%p742) target = $region44
        $region43: #{tpu_custom_call.1} parent=31 // pred_region
          %s746 = ssub.s32 128, 128
          %747 = vsyncadd %s738, %s746
          %s748 = smul.addr %s21, 128
          %s749 = scalar_lea.hbm %s3, %s748
          %s751 = sshll.u32 %s741, 4
          %s752 = int_to_ptr.vmem [resolvable:$true] %s751
          %754 = dma.vmem_to_hbm [thread:$0]  %s752, 128, %s749, %s738
        $region44: #{tpu_custom_call.1} parent=31 // pred_fallthru
          _
      $region32: #{tpu_custom_call.1} parent=5 // pred_fallthru
        _
      %p755 = scmp.le.s32.totalorder 2, %s16
      // Predicated region
      $region45: #{tpu_custom_call.1} parent=5 // pred_check
        %p756 = pneg %p755
      $region46: #{tpu_custom_call.1} parent=5 // pred_check_branch
        %758 = sbr.rel (%p756) target = $region48
      $region47: #{tpu_custom_call.1} parent=5 // pred_region
        %s759 = ssub.s32 %s16, 2
        // Predicated region
        $region49: #{tpu_custom_call.1} parent=47 // pred_check
          %p760 = pneg %p113
        $region50: #{tpu_custom_call.1} parent=47 // pred_check_branch
          %762 = sbr.rel (%p760) target = $region52
        $region51: #{tpu_custom_call.1} parent=47 // pred_region
          %s763 = sand.u32 %s98, 1
          %s764 = scalar_lea.sflag [#allocation4], %s763
          %s765 = sand.u32 %s98, 1
          %s766 = smul.addr %s765, 8
          %s767 = scalar_lea.vmem [#allocation7], %s766
          %768 = dma.done %s764, 128
        $region52: #{tpu_custom_call.1} parent=47 // pred_fallthru
          _
      $region48: #{tpu_custom_call.1} parent=5 // pred_fallthru
        _
    $region6: #{tpu_custom_call.1} parent=1 // loop_footer
      %s20 = sadd.s32 1, %s16
    $region7: #{tpu_custom_call.1} parent=1 // loop_footer_branch
      %15 = sbr.rel target = $region3
    $region8: #{tpu_custom_call.1} parent=1 // loop_exit
      _
    %769 = vsyncpa [#allocation3], 1
    %s770 = scalar_lea.sflag [#allocation3], 1
    %771 = vsyncpa %s770, 1
    %772 = vsyncpa [#allocation6], 1
    %773 = vsyncpa [#allocation4], 1
    %s774 = scalar_lea.sflag [#allocation4], 1
    %775 = vsyncpa %s774, 1

</llo_original>
